<compile_context>
chip_gen: v7x
topology: tpu7x:2x2x1
jax: 0.10.0
libtpu: 0.0.40
codegen_flags: <defaults>
</compile_context>

<pallas_src>
import jax
import jax.numpy as jnp
from jax.experimental import pallas as pl
from jax.experimental.pallas import tpu as pltpu


NUM_LAYERS = 8
LANE = 128
SUBLANE = 8


def _round_up(x, m):
    return ((x + m - 1) // m) * m


def _aligner_kernel(x_ref, w_ref, b_ref, out_ref):
    # x_ref:  (tm, Dp)            activations for this row tile
    # w_ref:  (NUM_LAYERS, Dp, Dp) stacked, zero-padded, pre-transposed weights
    # b_ref:  (NUM_LAYERS, 1, Dp)  stacked, zero-padded biases
    # out_ref:(tm, Dp)
    h = x_ref[...]
    for layer in range(NUM_LAYERS):
        w = w_ref[layer]            # (Dp, Dp)
        b = b_ref[layer]            # (1, Dp)
        h = jnp.dot(h, w, preferred_element_type=jnp.float32) + b
        if layer < NUM_LAYERS - 1:
            h = jnp.maximum(h, 0.0)  # ReLU after fc1..fc7, not after fc8
    out_ref[...] = h.astype(out_ref.dtype)


def feature_aligner(x, weights, biases, *, tile_rows=512):
    """x: (..., input_dim). weights[i]: (d_in_i, d_out_i) (PyTorch weight.T).
    biases[i]: (d_out_i,). Returns (..., output_dim)."""
    assert len(weights) == NUM_LAYERS and len(biases) == NUM_LAYERS
    # The module's layer chain only type-checks if consecutive dims match
    # (i.e. hidden_dim == output_dim for the real FeatureAligner).
    for i in range(1, NUM_LAYERS):
        assert weights[i].shape[0] == weights[i - 1].shape[1], (
            f"layer {i} input dim {weights[i].shape[0]} != "
            f"layer {i - 1} output dim {weights[i - 1].shape[1]}")
        assert biases[i].shape[0] == weights[i].shape[1]

    orig_shape = x.shape
    d_in = orig_shape[-1]
    d_out = weights[-1].shape[1]
    assert weights[0].shape[0] == d_in

    # Pad every feature dim to a common lane-aligned width Dp.
    all_dims = [d_in] + [w.shape[1] for w in weights]
    d_pad = _round_up(max(all_dims), LANE)

    # Stack + zero-pad weights / biases once (grid-constant blocks).
    w_stack = jnp.zeros((NUM_LAYERS, d_pad, d_pad), jnp.float32)
    b_stack = jnp.zeros((NUM_LAYERS, 1, d_pad), jnp.float32)
    for i, (w, b) in enumerate(zip(weights, biases)):
        w_stack = w_stack.at[i, : w.shape[0], : w.shape[1]].set(
            w.astype(jnp.float32))
        b_stack = b_stack.at[i, 0, : b.shape[0]].set(b.astype(jnp.float32))

    # Flatten rows, pad row count to a multiple of the row tile.
    x2 = x.reshape(-1, d_in)
    n = x2.shape[0]
    tm = min(tile_rows, _round_up(n, SUBLANE))   # sublane-aligned row tile
    n_pad = _round_up(n, tm)
    x2p = jnp.zeros((n_pad, d_pad), x.dtype)
    x2p = x2p.at[:n, :d_in].set(x2)

    grid = (n_pad // tm,)

    out = pl.pallas_call(
        _aligner_kernel,
        out_shape=jax.ShapeDtypeStruct((n_pad, d_pad), x.dtype),
        grid_spec=pltpu.PrefetchScalarGridSpec(
            num_scalar_prefetch=0,
            grid=grid,
            in_specs=[
                pl.BlockSpec((tm, d_pad), lambda i: (i, 0)),
                pl.BlockSpec((NUM_LAYERS, d_pad, d_pad), lambda i: (0, 0, 0)),
                pl.BlockSpec((NUM_LAYERS, 1, d_pad), lambda i: (0, 0, 0)),
            ],
            out_specs=pl.BlockSpec((tm, d_pad), lambda i: (i, 0)),
        ),
        compiler_params=pltpu.CompilerParams(
            dimension_semantics=("parallel",),
            vmem_limit_bytes=48 * 1024 * 1024,
        ),
    )(x2p, w_stack, b_stack)

    return out[:n, :d_out].reshape(*orig_shape[:-1], d_out)


def init_params(key, input_dim, hidden_dim, output_dim):
    """Deterministic init mimicking nn.Linear default (U[-1/sqrt(fan_in), +]).
    Weights stored as (d_in, d_out): transpose of the PyTorch (out, in) layout."""
    # fc5 takes hidden_dim while fc4 emits output_dim -> module requires equality.
    assert hidden_dim == output_dim, (
        "FeatureAligner's layer chain requires hidden_dim == output_dim")
    dims = [
        (input_dim, hidden_dim),    # fc1
        (hidden_dim, output_dim),   # fc2
        (output_dim, output_dim),   # fc3
        (output_dim, output_dim),   # fc4
        (hidden_dim, output_dim),   # fc5
        (output_dim, output_dim),   # fc6
        (output_dim, output_dim),   # fc7
        (output_dim, output_dim),   # fc8
    ]
    weights, biases = [], []
    for (di, do) in dims:
        key, kw, kb = jax.random.split(key, 3)
        bound = 1.0 / jnp.sqrt(di)
        w = jax.random.uniform(kw, (di, do), jnp.float32, -bound, bound)
        b = jax.random.uniform(kb, (do,), jnp.float32, -bound, bound)
        weights.append(w)
        biases.append(b)
    return weights, biases


def feature_aligner_ref(x, weights, biases):
    h = x.astype(jnp.float32)
    for i, (w, b) in enumerate(zip(weights, biases)):
        h = h @ w + b
        if i < NUM_LAYERS - 1:
            h = jnp.maximum(h, 0.0)
    return h.astype(x.dtype)


if __name__ == "__main__":
    key = jax.random.PRNGKey(0)
    key, kx = jax.random.split(key)

    # Small shapes consistent with the module's forward (features-last MLP).
    batch, seq, dim = 2, 8, 32       # input_dim = hidden_dim = output_dim = 32
    x = jax.random.normal(kx, (batch, seq, dim), jnp.float32)

    weights, biases = init_params(key, dim, dim, dim)

    out = feature_aligner(x, weights, biases)
    out = jax.block_until_ready(out)

    ref = feature_aligner_ref(x.reshape(-1, dim), weights, biases).reshape(out.shape)
    assert out.shape == (batch, seq, dim)
    assert jnp.allclose(out, ref, atol=1e-4, rtol=1e-4)

    print("KERNEL_OK")
</pallas_src>

<mosaic_0001>
module attributes {stable_mosaic.version = 11 : i64} {
  func.func @_aligner_kernel(%arg0: i32, %arg1: memref<16x128xf32, #tpu.memory_space<vmem>>, %arg2: memref<8x128x128xf32, #tpu.memory_space<vmem>>, %arg3: memref<8x1x128xf32, #tpu.memory_space<vmem>>, %arg4: memref<16x128xf32, #tpu.memory_space<vmem>>) attributes {dimension_semantics = [#tpu.dimension_semantics<parallel>], iteration_bounds = array<i64: 1>, scalar_prefetch = 0 : i64, scratch_operands = 0 : i64, tpu.core_type = #tpu.core_type<tc>, window_params = [{transform_indices = @transform_0, window_bounds = array<i64: 16, 128>}, {pipeline_mode = #tpu.pipeline_mode<synchronous>, transform_indices = @transform_1, window_bounds = array<i64: 8, 128, 128>}, {pipeline_mode = #tpu.pipeline_mode<synchronous>, transform_indices = @transform_2, window_bounds = array<i64: 8, 1, 128>}, {transform_indices = @transform_3, window_bounds = array<i64: 16, 128>}]} {
    %c0 = arith.constant 0 : index
    %c0_0 = arith.constant 0 : index
    %0 = vector.load %arg1[%c0, %c0_0] : memref<16x128xf32, #tpu.memory_space<vmem>>, vector<16x128xf32>
    %c0_1 = arith.constant 0 : index
    %c0_2 = arith.constant 0 : index
    %c0_3 = arith.constant 0 : index
    %1 = vector.load %arg2[%c0_1, %c0_2, %c0_3] : memref<8x128x128xf32, #tpu.memory_space<vmem>>, vector<1x128x128xf32>
    %2 = vector.shape_cast %1 : vector<1x128x128xf32> to vector<128x128xf32>
    %c0_4 = arith.constant 0 : index
    %c0_5 = arith.constant 0 : index
    %c0_6 = arith.constant 0 : index
    %3 = vector.load %arg3[%c0_4, %c0_5, %c0_6] : memref<8x1x128xf32, #tpu.memory_space<vmem>>, vector<1x1x128xf32>
    %4 = vector.shape_cast %3 : vector<1x1x128xf32> to vector<1x128xf32>
    %cst = arith.constant dense<0.000000e+00> : vector<16x128xf32>
    %5 = tpu.matmul %0, %2, %cst {dimension_numbers = #tpu.dot_dimension_numbers<[1], [0], [0], [1], [0, 0, 1, 1], [], []>} : vector<16x128xf32>, vector<128x128xf32>, vector<16x128xf32> -> vector<16x128xf32>
    %6 = vector.broadcast %4 : vector<1x128xf32> to vector<16x128xf32>
    %7 = arith.addf %5, %6 : vector<16x128xf32>
    %cst_7 = arith.constant 0.000000e+00 : f32
    %8 = vector.broadcast %cst_7 : f32 to vector<16x128xf32>
    %9 = arith.maximumf %7, %8 : vector<16x128xf32>
    %c1 = arith.constant 1 : index
    %c0_8 = arith.constant 0 : index
    %c0_9 = arith.constant 0 : index
    %10 = vector.load %arg2[%c1, %c0_8, %c0_9] : memref<8x128x128xf32, #tpu.memory_space<vmem>>, vector<1x128x128xf32>
    %11 = vector.shape_cast %10 : vector<1x128x128xf32> to vector<128x128xf32>
    %c1_10 = arith.constant 1 : index
    %c0_11 = arith.constant 0 : index
    %c0_12 = arith.constant 0 : index
    %12 = vector.load %arg3[%c1_10, %c0_11, %c0_12] : memref<8x1x128xf32, #tpu.memory_space<vmem>>, vector<1x1x128xf32>
    %13 = vector.shape_cast %12 : vector<1x1x128xf32> to vector<1x128xf32>
    %cst_13 = arith.constant dense<0.000000e+00> : vector<16x128xf32>
    %14 = tpu.matmul %9, %11, %cst_13 {dimension_numbers = #tpu.dot_dimension_numbers<[1], [0], [0], [1], [0, 0, 1, 1], [], []>} : vector<16x128xf32>, vector<128x128xf32>, vector<16x128xf32> -> vector<16x128xf32>
    %15 = vector.broadcast %13 : vector<1x128xf32> to vector<16x128xf32>
    %16 = arith.addf %14, %15 : vector<16x128xf32>
    %cst_14 = arith.constant 0.000000e+00 : f32
    %17 = vector.broadcast %cst_14 : f32 to vector<16x128xf32>
    %18 = arith.maximumf %16, %17 : vector<16x128xf32>
    %c2 = arith.constant 2 : index
    %c0_15 = arith.constant 0 : index
    %c0_16 = arith.constant 0 : index
    %19 = vector.load %arg2[%c2, %c0_15, %c0_16] : memref<8x128x128xf32, #tpu.memory_space<vmem>>, vector<1x128x128xf32>
    %20 = vector.shape_cast %19 : vector<1x128x128xf32> to vector<128x128xf32>
    %c2_17 = arith.constant 2 : index
    %c0_18 = arith.constant 0 : index
    %c0_19 = arith.constant 0 : index
    %21 = vector.load %arg3[%c2_17, %c0_18, %c0_19] : memref<8x1x128xf32, #tpu.memory_space<vmem>>, vector<1x1x128xf32>
    %22 = vector.shape_cast %21 : vector<1x1x128xf32> to vector<1x128xf32>
    %cst_20 = arith.constant dense<0.000000e+00> : vector<16x128xf32>
    %23 = tpu.matmul %18, %20, %cst_20 {dimension_numbers = #tpu.dot_dimension_numbers<[1], [0], [0], [1], [0, 0, 1, 1], [], []>} : vector<16x128xf32>, vector<128x128xf32>, vector<16x128xf32> -> vector<16x128xf32>
    %24 = vector.broadcast %22 : vector<1x128xf32> to vector<16x128xf32>
    %25 = arith.addf %23, %24 : vector<16x128xf32>
    %cst_21 = arith.constant 0.000000e+00 : f32
    %26 = vector.broadcast %cst_21 : f32 to vector<16x128xf32>
    %27 = arith.maximumf %25, %26 : vector<16x128xf32>
    %c3 = arith.constant 3 : index
    %c0_22 = arith.constant 0 : index
    %c0_23 = arith.constant 0 : index
    %28 = vector.load %arg2[%c3, %c0_22, %c0_23] : memref<8x128x128xf32, #tpu.memory_space<vmem>>, vector<1x128x128xf32>
    %29 = vector.shape_cast %28 : vector<1x128x128xf32> to vector<128x128xf32>
    %c3_24 = arith.constant 3 : index
    %c0_25 = arith.constant 0 : index
    %c0_26 = arith.constant 0 : index
    %30 = vector.load %arg3[%c3_24, %c0_25, %c0_26] : memref<8x1x128xf32, #tpu.memory_space<vmem>>, vector<1x1x128xf32>
    %31 = vector.shape_cast %30 : vector<1x1x128xf32> to vector<1x128xf32>
    %cst_27 = arith.constant dense<0.000000e+00> : vector<16x128xf32>
    %32 = tpu.matmul %27, %29, %cst_27 {dimension_numbers = #tpu.dot_dimension_numbers<[1], [0], [0], [1], [0, 0, 1, 1], [], []>} : vector<16x128xf32>, vector<128x128xf32>, vector<16x128xf32> -> vector<16x128xf32>
    %33 = vector.broadcast %31 : vector<1x128xf32> to vector<16x128xf32>
    %34 = arith.addf %32, %33 : vector<16x128xf32>
    %cst_28 = arith.constant 0.000000e+00 : f32
    %35 = vector.broadcast %cst_28 : f32 to vector<16x128xf32>
    %36 = arith.maximumf %34, %35 : vector<16x128xf32>
    %c4 = arith.constant 4 : index
    %c0_29 = arith.constant 0 : index
    %c0_30 = arith.constant 0 : index
    %37 = vector.load %arg2[%c4, %c0_29, %c0_30] : memref<8x128x128xf32, #tpu.memory_space<vmem>>, vector<1x128x128xf32>
    %38 = vector.shape_cast %37 : vector<1x128x128xf32> to vector<128x128xf32>
    %c4_31 = arith.constant 4 : index
    %c0_32 = arith.constant 0 : index
    %c0_33 = arith.constant 0 : index
    %39 = vector.load %arg3[%c4_31, %c0_32, %c0_33] : memref<8x1x128xf32, #tpu.memory_space<vmem>>, vector<1x1x128xf32>
    %40 = vector.shape_cast %39 : vector<1x1x128xf32> to vector<1x128xf32>
    %cst_34 = arith.constant dense<0.000000e+00> : vector<16x128xf32>
    %41 = tpu.matmul %36, %38, %cst_34 {dimension_numbers = #tpu.dot_dimension_numbers<[1], [0], [0], [1], [0, 0, 1, 1], [], []>} : vector<16x128xf32>, vector<128x128xf32>, vector<16x128xf32> -> vector<16x128xf32>
    %42 = vector.broadcast %40 : vector<1x128xf32> to vector<16x128xf32>
    %43 = arith.addf %41, %42 : vector<16x128xf32>
    %cst_35 = arith.constant 0.000000e+00 : f32
    %44 = vector.broadcast %cst_35 : f32 to vector<16x128xf32>
    %45 = arith.maximumf %43, %44 : vector<16x128xf32>
    %c5 = arith.constant 5 : index
    %c0_36 = arith.constant 0 : index
    %c0_37 = arith.constant 0 : index
    %46 = vector.load %arg2[%c5, %c0_36, %c0_37] : memref<8x128x128xf32, #tpu.memory_space<vmem>>, vector<1x128x128xf32>
    %47 = vector.shape_cast %46 : vector<1x128x128xf32> to vector<128x128xf32>
    %c5_38 = arith.constant 5 : index
    %c0_39 = arith.constant 0 : index
    %c0_40 = arith.constant 0 : index
    %48 = vector.load %arg3[%c5_38, %c0_39, %c0_40] : memref<8x1x128xf32, #tpu.memory_space<vmem>>, vector<1x1x128xf32>
    %49 = vector.shape_cast %48 : vector<1x1x128xf32> to vector<1x128xf32>
    %cst_41 = arith.constant dense<0.000000e+00> : vector<16x128xf32>
    %50 = tpu.matmul %45, %47, %cst_41 {dimension_numbers = #tpu.dot_dimension_numbers<[1], [0], [0], [1], [0, 0, 1, 1], [], []>} : vector<16x128xf32>, vector<128x128xf32>, vector<16x128xf32> -> vector<16x128xf32>
    %51 = vector.broadcast %49 : vector<1x128xf32> to vector<16x128xf32>
    %52 = arith.addf %50, %51 : vector<16x128xf32>
    %cst_42 = arith.constant 0.000000e+00 : f32
    %53 = vector.broadcast %cst_42 : f32 to vector<16x128xf32>
    %54 = arith.maximumf %52, %53 : vector<16x128xf32>
    %c6 = arith.constant 6 : index
    %c0_43 = arith.constant 0 : index
    %c0_44 = arith.constant 0 : index
    %55 = vector.load %arg2[%c6, %c0_43, %c0_44] : memref<8x128x128xf32, #tpu.memory_space<vmem>>, vector<1x128x128xf32>
    %56 = vector.shape_cast %55 : vector<1x128x128xf32> to vector<128x128xf32>
    %c6_45 = arith.constant 6 : index
    %c0_46 = arith.constant 0 : index
    %c0_47 = arith.constant 0 : index
    %57 = vector.load %arg3[%c6_45, %c0_46, %c0_47] : memref<8x1x128xf32, #tpu.memory_space<vmem>>, vector<1x1x128xf32>
    %58 = vector.shape_cast %57 : vector<1x1x128xf32> to vector<1x128xf32>
    %cst_48 = arith.constant dense<0.000000e+00> : vector<16x128xf32>
    %59 = tpu.matmul %54, %56, %cst_48 {dimension_numbers = #tpu.dot_dimension_numbers<[1], [0], [0], [1], [0, 0, 1, 1], [], []>} : vector<16x128xf32>, vector<128x128xf32>, vector<16x128xf32> -> vector<16x128xf32>
    %60 = vector.broadcast %58 : vector<1x128xf32> to vector<16x128xf32>
    %61 = arith.addf %59, %60 : vector<16x128xf32>
    %cst_49 = arith.constant 0.000000e+00 : f32
    %62 = vector.broadcast %cst_49 : f32 to vector<16x128xf32>
    %63 = arith.maximumf %61, %62 : vector<16x128xf32>
    %c7 = arith.constant 7 : index
    %c0_50 = arith.constant 0 : index
    %c0_51 = arith.constant 0 : index
    %64 = vector.load %arg2[%c7, %c0_50, %c0_51] : memref<8x128x128xf32, #tpu.memory_space<vmem>>, vector<1x128x128xf32>
    %65 = vector.shape_cast %64 : vector<1x128x128xf32> to vector<128x128xf32>
    %c7_52 = arith.constant 7 : index
    %c0_53 = arith.constant 0 : index
    %c0_54 = arith.constant 0 : index
    %66 = vector.load %arg3[%c7_52, %c0_53, %c0_54] : memref<8x1x128xf32, #tpu.memory_space<vmem>>, vector<1x1x128xf32>
    %67 = vector.shape_cast %66 : vector<1x1x128xf32> to vector<1x128xf32>
    %cst_55 = arith.constant dense<0.000000e+00> : vector<16x128xf32>
    %68 = tpu.matmul %63, %65, %cst_55 {dimension_numbers = #tpu.dot_dimension_numbers<[1], [0], [0], [1], [0, 0, 1, 1], [], []>} : vector<16x128xf32>, vector<128x128xf32>, vector<16x128xf32> -> vector<16x128xf32>
    %69 = vector.broadcast %67 : vector<1x128xf32> to vector<16x128xf32>
    %70 = arith.addf %68, %69 : vector<16x128xf32>
    %c0_56 = arith.constant 0 : index
    %c0_57 = arith.constant 0 : index
    %71 = vector.load %arg4[%c0_56, %c0_57] : memref<16x128xf32, #tpu.memory_space<vmem>>, vector<16x128xf32>
    tpu.vector_store %arg4[%c0_56, %c0_57], %70 {strides = array<i32>} : memref<16x128xf32, #tpu.memory_space<vmem>>, vector<16x128xf32>,
    return
  }
  func.func @transform_0(%arg0: i32) -> (i32, i32) {
    %c0_i32 = arith.constant 0 : i32
    %c0_i32_0 = arith.constant 0 : i32
    return %arg0, %c0_i32 : i32, i32
  }
  func.func @transform_1(%arg0: i32) -> (i32, i32, i32) {
    %c0_i32 = arith.constant 0 : i32
    %c0_i32_0 = arith.constant 0 : i32
    %c0_i32_1 = arith.constant 0 : i32
    %c0_i32_2 = arith.constant 0 : i32
    return %c0_i32, %c0_i32_0, %c0_i32_1 : i32, i32, i32
  }
  func.func @transform_2(%arg0: i32) -> (i32, i32, i32) {
    %c0_i32 = arith.constant 0 : i32
    %c0_i32_0 = arith.constant 0 : i32
    %c0_i32_1 = arith.constant 0 : i32
    %c0_i32_2 = arith.constant 0 : i32
    return %c0_i32, %c0_i32_0, %c0_i32_1 : i32, i32, i32
  }
  func.func @transform_3(%arg0: i32) -> (i32, i32) {
    %c0_i32 = arith.constant 0 : i32
    %c0_i32_0 = arith.constant 0 : i32
    return %arg0, %c0_i32 : i32, i32
  }
}

</mosaic_0001>

<llo_original>
// kernel: tpu_custom_call.1
$region0: #{tpu_custom_call.1}
  #allocation0 [shape = 'u32[]', space=smem, size = 0x4, offset = 0x4, fixed_abs, tag = 'smem constant byte address 0x4 - core index']
  #allocation1 [shape = 'u32[144,128]{1,0:T(1,128)}', space=vmem, size = 0x12000, scoped, tag = 'internal scratch']
  %s0 = inlined_call_operand.hbm [shape: f32[16,128], index: 0, kind: input, shape index: {}]
  %s1 = inlined_call_operand.hbm [shape: f32[8,128,128], index: 1, kind: input, shape index: {}]
  %s2 = inlined_call_operand.hbm [shape: f32[8,1,128], index: 2, kind: input, shape index: {}]
  %s3 = inlined_call_operand.hbm [shape: f32[16,128], index: 3, kind: output, shape index: {}]
  %s4 = sld [smem:[#allocation0]]
  $region34: #{tpu_custom_call.1} parent=0
    _
  %s6 = ssub.s32 1, %s4
  %s7 = scalar_select 0, %s6, %s4
  $region1: #{tpu_custom_call.1} parent=0
    #allocation2 [shape = 'u8[8192]{0}', space=vmem, size = 0x2000, scoped, tag = 'input window, operand 0, single buffered']
    #allocation3 [shape = 's32[1]{0}', space=sflag, size = 0x4, scoped, tag = 'scoped memory for tpu_custom_call.1']
    #allocation4 [shape = 's32[1]{0}', space=sflag, size = 0x4, scoped, tag = 'scoped memory for tpu_custom_call.1']
    #allocation5 [shape = 'u8[524288]{0}', space=vmem, size = 0x80000, scoped, tag = 'input window, operand 1, single buffered']
    #allocation6 [shape = 's32[1]{0}', space=sflag, size = 0x4, scoped, tag = 'scoped memory for tpu_custom_call.1']
    #allocation7 [shape = 'u8[4096]{0}', space=vmem, size = 0x1000, scoped, tag = 'input window, operand 2, single buffered']
    #allocation8 [shape = 'u8[8192]{0}', space=vmem, size = 0x2000, scoped, tag = 'output window, operand 0, single buffered']
    %8 = vsyncpa [#allocation3], 0
    %9 = vsyncpa [#allocation6], 0
    %10 = vsyncpa [#allocation4], 0
    // Predicated region
    $region2: #{tpu_custom_call.1} parent=1 // pred_check
      _
    $region3: #{tpu_custom_call.1} parent=1 // pred_check_branch
      %12 = sbr.rel (0) target = $region5
    $region4: #{tpu_custom_call.1} parent=1 // pred_region
      %s14 = ssub.s32 256, 256
      %15 = vsyncadd [#allocation3], %s14
      %s16 = sshll.u32 [#allocation2], 4
      %s17 = int_to_ptr.vmem [resolvable:$true] %s16
      %22 = dma.hbm_to_vmem [thread:$0]  %s0, 256, %s17, [#allocation3], 128, 128, 8
    $region5: #{tpu_custom_call.1} parent=1 // pred_fallthru
      _
    // Predicated region
    $region6: #{tpu_custom_call.1} parent=1 // pred_check
      _
    $region7: #{tpu_custom_call.1} parent=1 // pred_check_branch
      %24 = sbr.rel (0) target = $region9
    $region8: #{tpu_custom_call.1} parent=1 // pred_region
      %s26 = ssub.s32 16384, 16384
      %27 = vsyncadd [#allocation6], %s26
      %s28 = sshll.u32 [#allocation5], 4
      %s29 = int_to_ptr.vmem [resolvable:$true] %s28
      %34 = dma.hbm_to_vmem [thread:$0]  %s1, 16384, %s29, [#allocation6], 128, 128, 8
    $region9: #{tpu_custom_call.1} parent=1 // pred_fallthru
      _
    // Predicated region
    $region10: #{tpu_custom_call.1} parent=1 // pred_check
      _
    $region11: #{tpu_custom_call.1} parent=1 // pred_check_branch
      %36 = sbr.rel (0) target = $region13
    $region12: #{tpu_custom_call.1} parent=1 // pred_region
      %s38 = ssub.s32 128, 128
      %39 = vsyncadd [#allocation6], %s38
      %s40 = sshll.u32 [#allocation7], 4
      %s41 = int_to_ptr.vmem [resolvable:$true] %s40
      %46 = dma.hbm_to_vmem [thread:$0]  %s2, 128, %s41, [#allocation6], 16, 16, 1
    $region13: #{tpu_custom_call.1} parent=1 // pred_fallthru
      _
    // Predicated region
    $region14: #{tpu_custom_call.1} parent=1 // pred_check
      _
    $region15: #{tpu_custom_call.1} parent=1 // pred_check_branch
      %48 = sbr.rel (0) target = $region17
    $region16: #{tpu_custom_call.1} parent=1 // pred_region
      %49 = dma.done [#allocation3], 256
    $region17: #{tpu_custom_call.1} parent=1 // pred_fallthru
      _
    // Predicated region
    $region18: #{tpu_custom_call.1} parent=1 // pred_check
      _
    $region19: #{tpu_custom_call.1} parent=1 // pred_check_branch
      %51 = sbr.rel (0) target = $region21
    $region20: #{tpu_custom_call.1} parent=1 // pred_region
      %52 = dma.done [#allocation6], 16384
    $region21: #{tpu_custom_call.1} parent=1 // pred_fallthru
      _
    // Predicated region
    $region22: #{tpu_custom_call.1} parent=1 // pred_check
      _
    $region23: #{tpu_custom_call.1} parent=1 // pred_check_branch
      %54 = sbr.rel (0) target = $region25
    $region24: #{tpu_custom_call.1} parent=1 // pred_region
      %55 = dma.done [#allocation6], 128
    $region25: #{tpu_custom_call.1} parent=1 // pred_fallthru
      _
    %v56 = vld [vmem:[#allocation2] sm:$0xff]
    %v57 = vld [vmem:[#allocation2 + $0x8] sm:$0xff]
    %v58 = vld [vmem:[#allocation5] sm:$0xff]
    %v59 = vld [vmem:[#allocation5 + $0x8] sm:$0xff]
    %v60 = vld [vmem:[#allocation5 + $0x10] sm:$0xff]
    %v61 = vld [vmem:[#allocation5 + $0x18] sm:$0xff]
    %v62 = vld [vmem:[#allocation5 + $0x20] sm:$0xff]
    %v63 = vld [vmem:[#allocation5 + $0x28] sm:$0xff]
    %v64 = vld [vmem:[#allocation5 + $0x30] sm:$0xff]
    %v65 = vld [vmem:[#allocation5 + $0x38] sm:$0xff]
    %v66 = vld [vmem:[#allocation5 + $0x40] sm:$0xff]
    %v67 = vld [vmem:[#allocation5 + $0x48] sm:$0xff]
    %v68 = vld [vmem:[#allocation5 + $0x50] sm:$0xff]
    %v69 = vld [vmem:[#allocation5 + $0x58] sm:$0xff]
    %v70 = vld [vmem:[#allocation5 + $0x60] sm:$0xff]
    %v71 = vld [vmem:[#allocation5 + $0x68] sm:$0xff]
    %v72 = vld [vmem:[#allocation5 + $0x70] sm:$0xff]
    %v73 = vld [vmem:[#allocation5 + $0x78] sm:$0xff]
    %v74 = vld [vmem:[#allocation7] sm:$0x1]
    %v76 = vlaneseq
    %v77 = vshrl.u32 %v76, 7
    %v78 = vsub.s32 0, %v77
    %v79 = vrot.slane %v74, %v78
    %81 = vmatprep.subr.mxu0 0.0
    %82 = vmatpush1.msra.mxu0 %v58
    %83 = vmatprep.subr.mxu0 0.0
    %84 = vmatpush1.msra.mxu0 %v59
    %85 = vmatprep.subr.mxu0 0.0
    %86 = vmatpush1.msra.mxu0 %v60
    %87 = vmatprep.subr.mxu0 0.0
    %88 = vmatpush1.msra.mxu0 %v61
    %89 = vmatprep.subr.mxu0 0.0
    %90 = vmatpush1.msra.mxu0 %v62
    %91 = vmatprep.subr.mxu0 0.0
    %92 = vmatpush1.msra.mxu0 %v63
    %93 = vmatprep.subr.mxu0 0.0
    %94 = vmatpush1.msra.mxu0 %v64
    %95 = vmatprep.subr.mxu0 0.0
    %96 = vmatpush1.msra.mxu0 %v65
    %97 = vmatprep.subr.mxu0 0.0
    %98 = vmatpush1.msra.mxu0 %v66
    %99 = vmatprep.subr.mxu0 0.0
    %100 = vmatpush1.msra.mxu0 %v67
    %101 = vmatprep.subr.mxu0 0.0
    %102 = vmatpush1.msra.mxu0 %v68
    %103 = vmatprep.subr.mxu0 0.0
    %104 = vmatpush1.msra.mxu0 %v69
    %105 = vmatprep.subr.mxu0 0.0
    %106 = vmatpush1.msra.mxu0 %v70
    %107 = vmatprep.subr.mxu0 0.0
    %108 = vmatpush1.msra.mxu0 %v71
    %109 = vmatprep.subr.mxu0 0.0
    %110 = vmatpush1.msra.mxu0 %v72
    %111 = vmatprep.subr.mxu0 0.0
    %112 = vmatpush1.msra.mxu0 %v73
    %113 = vmatprep.subr.mxu0 0.0
    %114 = vmatpush1.msra.mxu0 0.0
    %115 = vmatprep.subr.mxu0 0.0
    %116 = vmatpush1.msra.mxu0 0.0
    %117 = vmatprep.subr.mxu0 0.0
    %118 = vmatpush1.msra.mxu0 0.0
    %119 = vmatprep.subr.mxu0 0.0
    %120 = vmatpush1.msra.mxu0 0.0
    %121 = vmatprep.subr.mxu0 0.0
    %122 = vmatpush1.msra.mxu0 0.0
    %123 = vmatprep.subr.mxu0 0.0
    %124 = vmatpush1.msra.mxu0 0.0
    %125 = vmatprep.subr.mxu0 0.0
    %126 = vmatpush1.msra.mxu0 0.0
    %127 = vmatprep.subr.mxu0 0.0
    %128 = vmatpush1.msra.mxu0 0.0
    %129 = vmatprep.subr.mxu0 0.0
    %130 = vmatpush1.msra.mxu0 0.0
    %131 = vmatprep.subr.mxu0 0.0
    %132 = vmatpush1.msra.mxu0 0.0
    %133 = vmatprep.subr.mxu0 0.0
    %134 = vmatpush1.msra.mxu0 0.0
    %135 = vmatprep.subr.mxu0 0.0
    %136 = vmatpush1.msra.mxu0 0.0
    %137 = vmatprep.subr.mxu0 0.0
    %138 = vmatpush1.msra.mxu0 0.0
    %139 = vmatprep.subr.mxu0 0.0
    %140 = vmatpush1.msra.mxu0 0.0
    %141 = vmatprep.subr.mxu0 0.0
    %142 = vmatpush1.msra.mxu0 0.0
    %143 = vmatprep.subr.mxu0 0.0
    %144 = vmatpush1.msra.mxu0 0.0
    %145 = vmatprep.mubr.f32.mxu0 0.0
    %146 = vmatmul.mubr.f32.gmra.mrb[0].mxu0 %v56
    %v147 = vpop.f32.mrb[0].mxu0
    %v148 = vadd.f32 %v79, %v147
    %v149 = vpop.f32.mrb[0].mxu0
    %150 = vmatprep.mubr.f32.mxu0 0.0
    %151 = vmatmul.mubr.f32.gmra.mrb[0].mxu0 %v57
    %v152 = vpop.f32.mrb[0].mxu0
    %v153 = vadd.f32 %v79, %v152
    %v154 = vpop.f32.mrb[0].mxu0
    %155 = vdwg.mxu0
    %v156 = vmax.f32 %v148, 0.0
    %v157 = vmax.f32 %v153, 0.0
    %s158 = scalar_lea.vmem [#allocation5], 128
    %v159 = vld [vmem:[%s158] sm:$0xff]
    %v160 = vld [vmem:[%s158 + $0x8] sm:$0xff]
    %v161 = vld [vmem:[%s158 + $0x10] sm:$0xff]
    %v162 = vld [vmem:[%s158 + $0x18] sm:$0xff]
    %v163 = vld [vmem:[%s158 + $0x20] sm:$0xff]
    %v164 = vld [vmem:[%s158 + $0x28] sm:$0xff]
    %v165 = vld [vmem:[%s158 + $0x30] sm:$0xff]
    %v166 = vld [vmem:[%s158 + $0x38] sm:$0xff]
    %v167 = vld [vmem:[%s158 + $0x40] sm:$0xff]
    %v168 = vld [vmem:[%s158 + $0x48] sm:$0xff]
    %v169 = vld [vmem:[%s158 + $0x50] sm:$0xff]
    %v170 = vld [vmem:[%s158 + $0x58] sm:$0xff]
    %v171 = vld [vmem:[%s158 + $0x60] sm:$0xff]
    %v172 = vld [vmem:[%s158 + $0x68] sm:$0xff]
    %v173 = vld [vmem:[%s158 + $0x70] sm:$0xff]
    %v174 = vld [vmem:[%s158 + $0x78] sm:$0xff]
    %s175 = scalar_lea.vmem [#allocation7], 1
    %v176 = vld [vmem:[%s175] sm:$0x1]
    %v178 = vlaneseq
    %v179 = vshrl.u32 %v178, 7
    %v180 = vsub.s32 0, %v179
    %v181 = vrot.slane %v176, %v180
    %183 = vmatprep.subr.mxu0 0.0
    %184 = vmatpush1.msra.mxu0 %v159
    %185 = vmatprep.subr.mxu0 0.0
    %186 = vmatpush1.msra.mxu0 %v160
    %187 = vmatprep.subr.mxu0 0.0
    %188 = vmatpush1.msra.mxu0 %v161
    %189 = vmatprep.subr.mxu0 0.0
    %190 = vmatpush1.msra.mxu0 %v162
    %191 = vmatprep.subr.mxu0 0.0
    %192 = vmatpush1.msra.mxu0 %v163
    %193 = vmatprep.subr.mxu0 0.0
    %194 = vmatpush1.msra.mxu0 %v164
    %195 = vmatprep.subr.mxu0 0.0
    %196 = vmatpush1.msra.mxu0 %v165
    %197 = vmatprep.subr.mxu0 0.0
    %198 = vmatpush1.msra.mxu0 %v166
    %199 = vmatprep.subr.mxu0 0.0
    %200 = vmatpush1.msra.mxu0 %v167
    %201 = vmatprep.subr.mxu0 0.0
    %202 = vmatpush1.msra.mxu0 %v168
    %203 = vmatprep.subr.mxu0 0.0
    %204 = vmatpush1.msra.mxu0 %v169
    %205 = vmatprep.subr.mxu0 0.0
    %206 = vmatpush1.msra.mxu0 %v170
    %207 = vmatprep.subr.mxu0 0.0
    %208 = vmatpush1.msra.mxu0 %v171
    %209 = vmatprep.subr.mxu0 0.0
    %210 = vmatpush1.msra.mxu0 %v172
    %211 = vmatprep.subr.mxu0 0.0
    %212 = vmatpush1.msra.mxu0 %v173
    %213 = vmatprep.subr.mxu0 0.0
    %214 = vmatpush1.msra.mxu0 %v174
    %215 = vmatprep.subr.mxu0 0.0
    %216 = vmatpush1.msra.mxu0 0.0
    %217 = vmatprep.subr.mxu0 0.0
    %218 = vmatpush1.msra.mxu0 0.0
    %219 = vmatprep.subr.mxu0 0.0
    %220 = vmatpush1.msra.mxu0 0.0
    %221 = vmatprep.subr.mxu0 0.0
    %222 = vmatpush1.msra.mxu0 0.0
    %223 = vmatprep.subr.mxu0 0.0
    %224 = vmatpush1.msra.mxu0 0.0
    %225 = vmatprep.subr.mxu0 0.0
    %226 = vmatpush1.msra.mxu0 0.0
    %227 = vmatprep.subr.mxu0 0.0
    %228 = vmatpush1.msra.mxu0 0.0
    %229 = vmatprep.subr.mxu0 0.0
    %230 = vmatpush1.msra.mxu0 0.0
    %231 = vmatprep.subr.mxu0 0.0
    %232 = vmatpush1.msra.mxu0 0.0
    %233 = vmatprep.subr.mxu0 0.0
    %234 = vmatpush1.msra.mxu0 0.0
    %235 = vmatprep.subr.mxu0 0.0
    %236 = vmatpush1.msra.mxu0 0.0
    %237 = vmatprep.subr.mxu0 0.0
    %238 = vmatpush1.msra.mxu0 0.0
    %239 = vmatprep.subr.mxu0 0.0
    %240 = vmatpush1.msra.mxu0 0.0
    %241 = vmatprep.subr.mxu0 0.0
    %242 = vmatpush1.msra.mxu0 0.0
    %243 = vmatprep.subr.mxu0 0.0
    %244 = vmatpush1.msra.mxu0 0.0
    %245 = vmatprep.subr.mxu0 0.0
    %246 = vmatpush1.msra.mxu0 0.0
    %247 = vmatprep.mubr.f32.mxu0 0.0
    %248 = vmatmul.mubr.f32.gmra.mrb[0].mxu0 %v156
    %v249 = vpop.f32.mrb[0].mxu0
    %v250 = vadd.f32 %v181, %v249
    %v251 = vpop.f32.mrb[0].mxu0
    %252 = vmatprep.mubr.f32.mxu0 0.0
    %253 = vmatmul.mubr.f32.gmra.mrb[0].mxu0 %v157
    %v254 = vpop.f32.mrb[0].mxu0
    %v255 = vadd.f32 %v181, %v254
    %v256 = vpop.f32.mrb[0].mxu0
    %257 = vdwg.mxu0
    %v258 = vmax.f32 %v250, 0.0
    %v259 = vmax.f32 %v255, 0.0
    %s260 = scalar_lea.vmem [#allocation5], 256
    %v261 = vld [vmem:[%s260] sm:$0xff]
    %v262 = vld [vmem:[%s260 + $0x8] sm:$0xff]
    %v263 = vld [vmem:[%s260 + $0x10] sm:$0xff]
    %v264 = vld [vmem:[%s260 + $0x18] sm:$0xff]
    %v265 = vld [vmem:[%s260 + $0x20] sm:$0xff]
    %v266 = vld [vmem:[%s260 + $0x28] sm:$0xff]
    %v267 = vld [vmem:[%s260 + $0x30] sm:$0xff]
    %v268 = vld [vmem:[%s260 + $0x38] sm:$0xff]
    %v269 = vld [vmem:[%s260 + $0x40] sm:$0xff]
    %v270 = vld [vmem:[%s260 + $0x48] sm:$0xff]
    %v271 = vld [vmem:[%s260 + $0x50] sm:$0xff]
    %v272 = vld [vmem:[%s260 + $0x58] sm:$0xff]
    %v273 = vld [vmem:[%s260 + $0x60] sm:$0xff]
    %v274 = vld [vmem:[%s260 + $0x68] sm:$0xff]
    %v275 = vld [vmem:[%s260 + $0x70] sm:$0xff]
    %v276 = vld [vmem:[%s260 + $0x78] sm:$0xff]
    %s277 = scalar_lea.vmem [#allocation7], 2
    %v278 = vld [vmem:[%s277] sm:$0x1]
    %v280 = vlaneseq
    %v281 = vshrl.u32 %v280, 7
    %v282 = vsub.s32 0, %v281
    %v283 = vrot.slane %v278, %v282
    %285 = vmatprep.subr.mxu0 0.0
    %286 = vmatpush1.msra.mxu0 %v261
    %287 = vmatprep.subr.mxu0 0.0
    %288 = vmatpush1.msra.mxu0 %v262
    %289 = vmatprep.subr.mxu0 0.0
    %290 = vmatpush1.msra.mxu0 %v263
    %291 = vmatprep.subr.mxu0 0.0
    %292 = vmatpush1.msra.mxu0 %v264
    %293 = vmatprep.subr.mxu0 0.0
    %294 = vmatpush1.msra.mxu0 %v265
    %295 = vmatprep.subr.mxu0 0.0
    %296 = vmatpush1.msra.mxu0 %v266
    %297 = vmatprep.subr.mxu0 0.0
    %298 = vmatpush1.msra.mxu0 %v267
    %299 = vmatprep.subr.mxu0 0.0
    %300 = vmatpush1.msra.mxu0 %v268
    %301 = vmatprep.subr.mxu0 0.0
    %302 = vmatpush1.msra.mxu0 %v269
    %303 = vmatprep.subr.mxu0 0.0
    %304 = vmatpush1.msra.mxu0 %v270
    %305 = vmatprep.subr.mxu0 0.0
    %306 = vmatpush1.msra.mxu0 %v271
    %307 = vmatprep.subr.mxu0 0.0
    %308 = vmatpush1.msra.mxu0 %v272
    %309 = vmatprep.subr.mxu0 0.0
    %310 = vmatpush1.msra.mxu0 %v273
    %311 = vmatprep.subr.mxu0 0.0
    %312 = vmatpush1.msra.mxu0 %v274
    %313 = vmatprep.subr.mxu0 0.0
    %314 = vmatpush1.msra.mxu0 %v275
    %315 = vmatprep.subr.mxu0 0.0
    %316 = vmatpush1.msra.mxu0 %v276
    %317 = vmatprep.subr.mxu0 0.0
    %318 = vmatpush1.msra.mxu0 0.0
    %319 = vmatprep.subr.mxu0 0.0
    %320 = vmatpush1.msra.mxu0 0.0
    %321 = vmatprep.subr.mxu0 0.0
    %322 = vmatpush1.msra.mxu0 0.0
    %323 = vmatprep.subr.mxu0 0.0
    %324 = vmatpush1.msra.mxu0 0.0
    %325 = vmatprep.subr.mxu0 0.0
    %326 = vmatpush1.msra.mxu0 0.0
    %327 = vmatprep.subr.mxu0 0.0
    %328 = vmatpush1.msra.mxu0 0.0
    %329 = vmatprep.subr.mxu0 0.0
    %330 = vmatpush1.msra.mxu0 0.0
    %331 = vmatprep.subr.mxu0 0.0
    %332 = vmatpush1.msra.mxu0 0.0
    %333 = vmatprep.subr.mxu0 0.0
    %334 = vmatpush1.msra.mxu0 0.0
    %335 = vmatprep.subr.mxu0 0.0
    %336 = vmatpush1.msra.mxu0 0.0
    %337 = vmatprep.subr.mxu0 0.0
    %338 = vmatpush1.msra.mxu0 0.0
    %339 = vmatprep.subr.mxu0 0.0
    %340 = vmatpush1.msra.mxu0 0.0
    %341 = vmatprep.subr.mxu0 0.0
    %342 = vmatpush1.msra.mxu0 0.0
    %343 = vmatprep.subr.mxu0 0.0
    %344 = vmatpush1.msra.mxu0 0.0
    %345 = vmatprep.subr.mxu0 0.0
    %346 = vmatpush1.msra.mxu0 0.0
    %347 = vmatprep.subr.mxu0 0.0
    %348 = vmatpush1.msra.mxu0 0.0
    %349 = vmatprep.mubr.f32.mxu0 0.0
    %350 = vmatmul.mubr.f32.gmra.mrb[0].mxu0 %v258
    %v351 = vpop.f32.mrb[0].mxu0
    %v352 = vadd.f32 %v283, %v351
    %v353 = vpop.f32.mrb[0].mxu0
    %354 = vmatprep.mubr.f32.mxu0 0.0
    %355 = vmatmul.mubr.f32.gmra.mrb[0].mxu0 %v259
    %v356 = vpop.f32.mrb[0].mxu0
    %v357 = vadd.f32 %v283, %v356
    %v358 = vpop.f32.mrb[0].mxu0
    %359 = vdwg.mxu0
    %v360 = vmax.f32 %v352, 0.0
    %v361 = vmax.f32 %v357, 0.0
    %s362 = scalar_lea.vmem [#allocation5], 384
    %v363 = vld [vmem:[%s362] sm:$0xff]
    %v364 = vld [vmem:[%s362 + $0x8] sm:$0xff]
    %v365 = vld [vmem:[%s362 + $0x10] sm:$0xff]
    %v366 = vld [vmem:[%s362 + $0x18] sm:$0xff]
    %v367 = vld [vmem:[%s362 + $0x20] sm:$0xff]
    %v368 = vld [vmem:[%s362 + $0x28] sm:$0xff]
    %v369 = vld [vmem:[%s362 + $0x30] sm:$0xff]
    %v370 = vld [vmem:[%s362 + $0x38] sm:$0xff]
    %v371 = vld [vmem:[%s362 + $0x40] sm:$0xff]
    %v372 = vld [vmem:[%s362 + $0x48] sm:$0xff]
    %v373 = vld [vmem:[%s362 + $0x50] sm:$0xff]
    %v374 = vld [vmem:[%s362 + $0x58] sm:$0xff]
    %v375 = vld [vmem:[%s362 + $0x60] sm:$0xff]
    %v376 = vld [vmem:[%s362 + $0x68] sm:$0xff]
    %v377 = vld [vmem:[%s362 + $0x70] sm:$0xff]
    %v378 = vld [vmem:[%s362 + $0x78] sm:$0xff]
    %s379 = scalar_lea.vmem [#allocation7], 3
    %v380 = vld [vmem:[%s379] sm:$0x1]
    %v382 = vlaneseq
    %v383 = vshrl.u32 %v382, 7
    %v384 = vsub.s32 0, %v383
    %v385 = vrot.slane %v380, %v384
    %387 = vmatprep.subr.mxu0 0.0
    %388 = vmatpush1.msra.mxu0 %v363
    %389 = vmatprep.subr.mxu0 0.0
    %390 = vmatpush1.msra.mxu0 %v364
    %391 = vmatprep.subr.mxu0 0.0
    %392 = vmatpush1.msra.mxu0 %v365
    %393 = vmatprep.subr.mxu0 0.0
    %394 = vmatpush1.msra.mxu0 %v366
    %395 = vmatprep.subr.mxu0 0.0
    %396 = vmatpush1.msra.mxu0 %v367
    %397 = vmatprep.subr.mxu0 0.0
    %398 = vmatpush1.msra.mxu0 %v368
    %399 = vmatprep.subr.mxu0 0.0
    %400 = vmatpush1.msra.mxu0 %v369
    %401 = vmatprep.subr.mxu0 0.0
    %402 = vmatpush1.msra.mxu0 %v370
    %403 = vmatprep.subr.mxu0 0.0
    %404 = vmatpush1.msra.mxu0 %v371
    %405 = vmatprep.subr.mxu0 0.0
    %406 = vmatpush1.msra.mxu0 %v372
    %407 = vmatprep.subr.mxu0 0.0
    %408 = vmatpush1.msra.mxu0 %v373
    %409 = vmatprep.subr.mxu0 0.0
    %410 = vmatpush1.msra.mxu0 %v374
    %411 = vmatprep.subr.mxu0 0.0
    %412 = vmatpush1.msra.mxu0 %v375
    %413 = vmatprep.subr.mxu0 0.0
    %414 = vmatpush1.msra.mxu0 %v376
    %415 = vmatprep.subr.mxu0 0.0
    %416 = vmatpush1.msra.mxu0 %v377
    %417 = vmatprep.subr.mxu0 0.0
    %418 = vmatpush1.msra.mxu0 %v378
    %419 = vmatprep.subr.mxu0 0.0
    %420 = vmatpush1.msra.mxu0 0.0
    %421 = vmatprep.subr.mxu0 0.0
    %422 = vmatpush1.msra.mxu0 0.0
    %423 = vmatprep.subr.mxu0 0.0
    %424 = vmatpush1.msra.mxu0 0.0
    %425 = vmatprep.subr.mxu0 0.0
    %426 = vmatpush1.msra.mxu0 0.0
    %427 = vmatprep.subr.mxu0 0.0
    %428 = vmatpush1.msra.mxu0 0.0
    %429 = vmatprep.subr.mxu0 0.0
    %430 = vmatpush1.msra.mxu0 0.0
    %431 = vmatprep.subr.mxu0 0.0
    %432 = vmatpush1.msra.mxu0 0.0
    %433 = vmatprep.subr.mxu0 0.0
    %434 = vmatpush1.msra.mxu0 0.0
    %435 = vmatprep.subr.mxu0 0.0
    %436 = vmatpush1.msra.mxu0 0.0
    %437 = vmatprep.subr.mxu0 0.0
    %438 = vmatpush1.msra.mxu0 0.0
    %439 = vmatprep.subr.mxu0 0.0
    %440 = vmatpush1.msra.mxu0 0.0
    %441 = vmatprep.subr.mxu0 0.0
    %442 = vmatpush1.msra.mxu0 0.0
    %443 = vmatprep.subr.mxu0 0.0
    %444 = vmatpush1.msra.mxu0 0.0
    %445 = vmatprep.subr.mxu0 0.0
    %446 = vmatpush1.msra.mxu0 0.0
    %447 = vmatprep.subr.mxu0 0.0
    %448 = vmatpush1.msra.mxu0 0.0
    %449 = vmatprep.subr.mxu0 0.0
    %450 = vmatpush1.msra.mxu0 0.0
    %451 = vmatprep.mubr.f32.mxu0 0.0
    %452 = vmatmul.mubr.f32.gmra.mrb[0].mxu0 %v360
    %v453 = vpop.f32.mrb[0].mxu0
    %v454 = vadd.f32 %v385, %v453
    %v455 = vpop.f32.mrb[0].mxu0
    %456 = vmatprep.mubr.f32.mxu0 0.0
    %457 = vmatmul.mubr.f32.gmra.mrb[0].mxu0 %v361
    %v458 = vpop.f32.mrb[0].mxu0
    %v459 = vadd.f32 %v385, %v458
    %v460 = vpop.f32.mrb[0].mxu0
    %461 = vdwg.mxu0
    %v462 = vmax.f32 %v454, 0.0
    %v463 = vmax.f32 %v459, 0.0
    %s464 = scalar_lea.vmem [#allocation5], 512
    %v465 = vld [vmem:[%s464] sm:$0xff]
    %v466 = vld [vmem:[%s464 + $0x8] sm:$0xff]
    %v467 = vld [vmem:[%s464 + $0x10] sm:$0xff]
    %v468 = vld [vmem:[%s464 + $0x18] sm:$0xff]
    %v469 = vld [vmem:[%s464 + $0x20] sm:$0xff]
    %v470 = vld [vmem:[%s464 + $0x28] sm:$0xff]
    %v471 = vld [vmem:[%s464 + $0x30] sm:$0xff]
    %v472 = vld [vmem:[%s464 + $0x38] sm:$0xff]
    %v473 = vld [vmem:[%s464 + $0x40] sm:$0xff]
    %v474 = vld [vmem:[%s464 + $0x48] sm:$0xff]
    %v475 = vld [vmem:[%s464 + $0x50] sm:$0xff]
    %v476 = vld [vmem:[%s464 + $0x58] sm:$0xff]
    %v477 = vld [vmem:[%s464 + $0x60] sm:$0xff]
    %v478 = vld [vmem:[%s464 + $0x68] sm:$0xff]
    %v479 = vld [vmem:[%s464 + $0x70] sm:$0xff]
    %v480 = vld [vmem:[%s464 + $0x78] sm:$0xff]
    %s481 = scalar_lea.vmem [#allocation7], 4
    %v482 = vld [vmem:[%s481] sm:$0x1]
    %v484 = vlaneseq
    %v485 = vshrl.u32 %v484, 7
    %v486 = vsub.s32 0, %v485
    %v487 = vrot.slane %v482, %v486
    %489 = vmatprep.subr.mxu0 0.0
    %490 = vmatpush1.msra.mxu0 %v465
    %491 = vmatprep.subr.mxu0 0.0
    %492 = vmatpush1.msra.mxu0 %v466
    %493 = vmatprep.subr.mxu0 0.0
    %494 = vmatpush1.msra.mxu0 %v467
    %495 = vmatprep.subr.mxu0 0.0
    %496 = vmatpush1.msra.mxu0 %v468
    %497 = vmatprep.subr.mxu0 0.0
    %498 = vmatpush1.msra.mxu0 %v469
    %499 = vmatprep.subr.mxu0 0.0
    %500 = vmatpush1.msra.mxu0 %v470
    %501 = vmatprep.subr.mxu0 0.0
    %502 = vmatpush1.msra.mxu0 %v471
    %503 = vmatprep.subr.mxu0 0.0
    %504 = vmatpush1.msra.mxu0 %v472
    %505 = vmatprep.subr.mxu0 0.0
    %506 = vmatpush1.msra.mxu0 %v473
    %507 = vmatprep.subr.mxu0 0.0
    %508 = vmatpush1.msra.mxu0 %v474
    %509 = vmatprep.subr.mxu0 0.0
    %510 = vmatpush1.msra.mxu0 %v475
    %511 = vmatprep.subr.mxu0 0.0
    %512 = vmatpush1.msra.mxu0 %v476
    %513 = vmatprep.subr.mxu0 0.0
    %514 = vmatpush1.msra.mxu0 %v477
    %515 = vmatprep.subr.mxu0 0.0
    %516 = vmatpush1.msra.mxu0 %v478
    %517 = vmatprep.subr.mxu0 0.0
    %518 = vmatpush1.msra.mxu0 %v479
    %519 = vmatprep.subr.mxu0 0.0
    %520 = vmatpush1.msra.mxu0 %v480
    %521 = vmatprep.subr.mxu0 0.0
    %522 = vmatpush1.msra.mxu0 0.0
    %523 = vmatprep.subr.mxu0 0.0
    %524 = vmatpush1.msra.mxu0 0.0
    %525 = vmatprep.subr.mxu0 0.0
    %526 = vmatpush1.msra.mxu0 0.0
    %527 = vmatprep.subr.mxu0 0.0
    %528 = vmatpush1.msra.mxu0 0.0
    %529 = vmatprep.subr.mxu0 0.0
    %530 = vmatpush1.msra.mxu0 0.0
    %531 = vmatprep.subr.mxu0 0.0
    %532 = vmatpush1.msra.mxu0 0.0
    %533 = vmatprep.subr.mxu0 0.0
    %534 = vmatpush1.msra.mxu0 0.0
    %535 = vmatprep.subr.mxu0 0.0
    %536 = vmatpush1.msra.mxu0 0.0
    %537 = vmatprep.subr.mxu0 0.0
    %538 = vmatpush1.msra.mxu0 0.0
    %539 = vmatprep.subr.mxu0 0.0
    %540 = vmatpush1.msra.mxu0 0.0
    %541 = vmatprep.subr.mxu0 0.0
    %542 = vmatpush1.msra.mxu0 0.0
    %543 = vmatprep.subr.mxu0 0.0
    %544 = vmatpush1.msra.mxu0 0.0
    %545 = vmatprep.subr.mxu0 0.0
    %546 = vmatpush1.msra.mxu0 0.0
    %547 = vmatprep.subr.mxu0 0.0
    %548 = vmatpush1.msra.mxu0 0.0
    %549 = vmatprep.subr.mxu0 0.0
    %550 = vmatpush1.msra.mxu0 0.0
    %551 = vmatprep.subr.mxu0 0.0
    %552 = vmatpush1.msra.mxu0 0.0
    %553 = vmatprep.mubr.f32.mxu0 0.0
    %554 = vmatmul.mubr.f32.gmra.mrb[0].mxu0 %v462
    %v555 = vpop.f32.mrb[0].mxu0
    %v556 = vadd.f32 %v487, %v555
    %v557 = vpop.f32.mrb[0].mxu0
    %558 = vmatprep.mubr.f32.mxu0 0.0
    %559 = vmatmul.mubr.f32.gmra.mrb[0].mxu0 %v463
    %v560 = vpop.f32.mrb[0].mxu0
    %v561 = vadd.f32 %v487, %v560
    %v562 = vpop.f32.mrb[0].mxu0
    %563 = vdwg.mxu0
    %v564 = vmax.f32 %v556, 0.0
    %v565 = vmax.f32 %v561, 0.0
    %s566 = scalar_lea.vmem [#allocation5], 640
    %v567 = vld [vmem:[%s566] sm:$0xff]
    %v568 = vld [vmem:[%s566 + $0x8] sm:$0xff]
    %v569 = vld [vmem:[%s566 + $0x10] sm:$0xff]
    %v570 = vld [vmem:[%s566 + $0x18] sm:$0xff]
    %v571 = vld [vmem:[%s566 + $0x20] sm:$0xff]
    %v572 = vld [vmem:[%s566 + $0x28] sm:$0xff]
    %v573 = vld [vmem:[%s566 + $0x30] sm:$0xff]
    %v574 = vld [vmem:[%s566 + $0x38] sm:$0xff]
    %v575 = vld [vmem:[%s566 + $0x40] sm:$0xff]
    %v576 = vld [vmem:[%s566 + $0x48] sm:$0xff]
    %v577 = vld [vmem:[%s566 + $0x50] sm:$0xff]
    %v578 = vld [vmem:[%s566 + $0x58] sm:$0xff]
    %v579 = vld [vmem:[%s566 + $0x60] sm:$0xff]
    %v580 = vld [vmem:[%s566 + $0x68] sm:$0xff]
    %v581 = vld [vmem:[%s566 + $0x70] sm:$0xff]
    %v582 = vld [vmem:[%s566 + $0x78] sm:$0xff]
    %s583 = scalar_lea.vmem [#allocation7], 5
    %v584 = vld [vmem:[%s583] sm:$0x1]
    %v586 = vlaneseq
    %v587 = vshrl.u32 %v586, 7
    %v588 = vsub.s32 0, %v587
    %v589 = vrot.slane %v584, %v588
    %591 = vmatprep.subr.mxu0 0.0
    %592 = vmatpush1.msra.mxu0 %v567
    %593 = vmatprep.subr.mxu0 0.0
    %594 = vmatpush1.msra.mxu0 %v568
    %595 = vmatprep.subr.mxu0 0.0
    %596 = vmatpush1.msra.mxu0 %v569
    %597 = vmatprep.subr.mxu0 0.0
    %598 = vmatpush1.msra.mxu0 %v570
    %599 = vmatprep.subr.mxu0 0.0
    %600 = vmatpush1.msra.mxu0 %v571
    %601 = vmatprep.subr.mxu0 0.0
    %602 = vmatpush1.msra.mxu0 %v572
    %603 = vmatprep.subr.mxu0 0.0
    %604 = vmatpush1.msra.mxu0 %v573
    %605 = vmatprep.subr.mxu0 0.0
    %606 = vmatpush1.msra.mxu0 %v574
    %607 = vmatprep.subr.mxu0 0.0
    %608 = vmatpush1.msra.mxu0 %v575
    %609 = vmatprep.subr.mxu0 0.0
    %610 = vmatpush1.msra.mxu0 %v576
    %611 = vmatprep.subr.mxu0 0.0
    %612 = vmatpush1.msra.mxu0 %v577
    %613 = vmatprep.subr.mxu0 0.0
    %614 = vmatpush1.msra.mxu0 %v578
    %615 = vmatprep.subr.mxu0 0.0
    %616 = vmatpush1.msra.mxu0 %v579
    %617 = vmatprep.subr.mxu0 0.0
    %618 = vmatpush1.msra.mxu0 %v580
    %619 = vmatprep.subr.mxu0 0.0
    %620 = vmatpush1.msra.mxu0 %v581
    %621 = vmatprep.subr.mxu0 0.0
    %622 = vmatpush1.msra.mxu0 %v582
    %623 = vmatprep.subr.mxu0 0.0
    %624 = vmatpush1.msra.mxu0 0.0
    %625 = vmatprep.subr.mxu0 0.0
    %626 = vmatpush1.msra.mxu0 0.0
    %627 = vmatprep.subr.mxu0 0.0
    %628 = vmatpush1.msra.mxu0 0.0
    %629 = vmatprep.subr.mxu0 0.0
    %630 = vmatpush1.msra.mxu0 0.0
    %631 = vmatprep.subr.mxu0 0.0
    %632 = vmatpush1.msra.mxu0 0.0
    %633 = vmatprep.subr.mxu0 0.0
    %634 = vmatpush1.msra.mxu0 0.0
    %635 = vmatprep.subr.mxu0 0.0
    %636 = vmatpush1.msra.mxu0 0.0
    %637 = vmatprep.subr.mxu0 0.0
    %638 = vmatpush1.msra.mxu0 0.0
    %639 = vmatprep.subr.mxu0 0.0
    %640 = vmatpush1.msra.mxu0 0.0
    %641 = vmatprep.subr.mxu0 0.0
    %642 = vmatpush1.msra.mxu0 0.0
    %643 = vmatprep.subr.mxu0 0.0
    %644 = vmatpush1.msra.mxu0 0.0
    %645 = vmatprep.subr.mxu0 0.0
    %646 = vmatpush1.msra.mxu0 0.0
    %647 = vmatprep.subr.mxu0 0.0
    %648 = vmatpush1.msra.mxu0 0.0
    %649 = vmatprep.subr.mxu0 0.0
    %650 = vmatpush1.msra.mxu0 0.0
    %651 = vmatprep.subr.mxu0 0.0
    %652 = vmatpush1.msra.mxu0 0.0
    %653 = vmatprep.subr.mxu0 0.0
    %654 = vmatpush1.msra.mxu0 0.0
    %655 = vmatprep.mubr.f32.mxu0 0.0
    %656 = vmatmul.mubr.f32.gmra.mrb[0].mxu0 %v564
    %v657 = vpop.f32.mrb[0].mxu0
    %v658 = vadd.f32 %v589, %v657
    %v659 = vpop.f32.mrb[0].mxu0
    %660 = vmatprep.mubr.f32.mxu0 0.0
    %661 = vmatmul.mubr.f32.gmra.mrb[0].mxu0 %v565
    %v662 = vpop.f32.mrb[0].mxu0
    %v663 = vadd.f32 %v589, %v662
    %v664 = vpop.f32.mrb[0].mxu0
    %665 = vdwg.mxu0
    %v666 = vmax.f32 %v658, 0.0
    %v667 = vmax.f32 %v663, 0.0
    %s668 = scalar_lea.vmem [#allocation5], 768
    %v669 = vld [vmem:[%s668] sm:$0xff]
    %v670 = vld [vmem:[%s668 + $0x8] sm:$0xff]
    %v671 = vld [vmem:[%s668 + $0x10] sm:$0xff]
    %v672 = vld [vmem:[%s668 + $0x18] sm:$0xff]
    %v673 = vld [vmem:[%s668 + $0x20] sm:$0xff]
    %v674 = vld [vmem:[%s668 + $0x28] sm:$0xff]
    %v675 = vld [vmem:[%s668 + $0x30] sm:$0xff]
    %v676 = vld [vmem:[%s668 + $0x38] sm:$0xff]
    %v677 = vld [vmem:[%s668 + $0x40] sm:$0xff]
    %v678 = vld [vmem:[%s668 + $0x48] sm:$0xff]
    %v679 = vld [vmem:[%s668 + $0x50] sm:$0xff]
    %v680 = vld [vmem:[%s668 + $0x58] sm:$0xff]
    %v681 = vld [vmem:[%s668 + $0x60] sm:$0xff]
    %v682 = vld [vmem:[%s668 + $0x68] sm:$0xff]
    %v683 = vld [vmem:[%s668 + $0x70] sm:$0xff]
    %v684 = vld [vmem:[%s668 + $0x78] sm:$0xff]
    %s685 = scalar_lea.vmem [#allocation7], 6
    %v686 = vld [vmem:[%s685] sm:$0x1]
    %v688 = vlaneseq
    %v689 = vshrl.u32 %v688, 7
    %v690 = vsub.s32 0, %v689
    %v691 = vrot.slane %v686, %v690
    %693 = vmatprep.subr.mxu0 0.0
    %694 = vmatpush1.msra.mxu0 %v669
    %695 = vmatprep.subr.mxu0 0.0
    %696 = vmatpush1.msra.mxu0 %v670
    %697 = vmatprep.subr.mxu0 0.0
    %698 = vmatpush1.msra.mxu0 %v671
    %699 = vmatprep.subr.mxu0 0.0
    %700 = vmatpush1.msra.mxu0 %v672
    %701 = vmatprep.subr.mxu0 0.0
    %702 = vmatpush1.msra.mxu0 %v673
    %703 = vmatprep.subr.mxu0 0.0
    %704 = vmatpush1.msra.mxu0 %v674
    %705 = vmatprep.subr.mxu0 0.0
    %706 = vmatpush1.msra.mxu0 %v675
    %707 = vmatprep.subr.mxu0 0.0
    %708 = vmatpush1.msra.mxu0 %v676
    %709 = vmatprep.subr.mxu0 0.0
    %710 = vmatpush1.msra.mxu0 %v677
    %711 = vmatprep.subr.mxu0 0.0
    %712 = vmatpush1.msra.mxu0 %v678
    %713 = vmatprep.subr.mxu0 0.0
    %714 = vmatpush1.msra.mxu0 %v679
    %715 = vmatprep.subr.mxu0 0.0
    %716 = vmatpush1.msra.mxu0 %v680
    %717 = vmatprep.subr.mxu0 0.0
    %718 = vmatpush1.msra.mxu0 %v681
    %719 = vmatprep.subr.mxu0 0.0
    %720 = vmatpush1.msra.mxu0 %v682
    %721 = vmatprep.subr.mxu0 0.0
    %722 = vmatpush1.msra.mxu0 %v683
    %723 = vmatprep.subr.mxu0 0.0
    %724 = vmatpush1.msra.mxu0 %v684
    %725 = vmatprep.subr.mxu0 0.0
    %726 = vmatpush1.msra.mxu0 0.0
    %727 = vmatprep.subr.mxu0 0.0
    %728 = vmatpush1.msra.mxu0 0.0
    %729 = vmatprep.subr.mxu0 0.0
    %730 = vmatpush1.msra.mxu0 0.0
    %731 = vmatprep.subr.mxu0 0.0
    %732 = vmatpush1.msra.mxu0 0.0
    %733 = vmatprep.subr.mxu0 0.0
    %734 = vmatpush1.msra.mxu0 0.0
    %735 = vmatprep.subr.mxu0 0.0
    %736 = vmatpush1.msra.mxu0 0.0
    %737 = vmatprep.subr.mxu0 0.0
    %738 = vmatpush1.msra.mxu0 0.0
    %739 = vmatprep.subr.mxu0 0.0
    %740 = vmatpush1.msra.mxu0 0.0
    %741 = vmatprep.subr.mxu0 0.0
    %742 = vmatpush1.msra.mxu0 0.0
    %743 = vmatprep.subr.mxu0 0.0
    %744 = vmatpush1.msra.mxu0 0.0
    %745 = vmatprep.subr.mxu0 0.0
    %746 = vmatpush1.msra.mxu0 0.0
    %747 = vmatprep.subr.mxu0 0.0
    %748 = vmatpush1.msra.mxu0 0.0
    %749 = vmatprep.subr.mxu0 0.0
    %750 = vmatpush1.msra.mxu0 0.0
    %751 = vmatprep.subr.mxu0 0.0
    %752 = vmatpush1.msra.mxu0 0.0
    %753 = vmatprep.subr.mxu0 0.0
    %754 = vmatpush1.msra.mxu0 0.0
    %755 = vmatprep.subr.mxu0 0.0
    %756 = vmatpush1.msra.mxu0 0.0
    %757 = vmatprep.mubr.f32.mxu0 0.0
    %758 = vmatmul.mubr.f32.gmra.mrb[0].mxu0 %v666
    %v759 = vpop.f32.mrb[0].mxu0
    %v760 = vadd.f32 %v691, %v759
    %v761 = vpop.f32.mrb[0].mxu0
    %762 = vmatprep.mubr.f32.mxu0 0.0
    %763 = vmatmul.mubr.f32.gmra.mrb[0].mxu0 %v667
    %v764 = vpop.f32.mrb[0].mxu0
    %v765 = vadd.f32 %v691, %v764
    %v766 = vpop.f32.mrb[0].mxu0
    %767 = vdwg.mxu0
    %v768 = vmax.f32 %v760, 0.0
    %v769 = vmax.f32 %v765, 0.0
    %s770 = scalar_lea.vmem [#allocation5], 896
    %v771 = vld [vmem:[%s770] sm:$0xff]
    %v772 = vld [vmem:[%s770 + $0x8] sm:$0xff]
    %v773 = vld [vmem:[%s770 + $0x10] sm:$0xff]
    %v774 = vld [vmem:[%s770 + $0x18] sm:$0xff]
    %v775 = vld [vmem:[%s770 + $0x20] sm:$0xff]
    %v776 = vld [vmem:[%s770 + $0x28] sm:$0xff]
    %v777 = vld [vmem:[%s770 + $0x30] sm:$0xff]
    %v778 = vld [vmem:[%s770 + $0x38] sm:$0xff]
    %v779 = vld [vmem:[%s770 + $0x40] sm:$0xff]
    %v780 = vld [vmem:[%s770 + $0x48] sm:$0xff]
    %v781 = vld [vmem:[%s770 + $0x50] sm:$0xff]
    %v782 = vld [vmem:[%s770 + $0x58] sm:$0xff]
    %v783 = vld [vmem:[%s770 + $0x60] sm:$0xff]
    %v784 = vld [vmem:[%s770 + $0x68] sm:$0xff]
    %v785 = vld [vmem:[%s770 + $0x70] sm:$0xff]
    %v786 = vld [vmem:[%s770 + $0x78] sm:$0xff]
    %s787 = scalar_lea.vmem [#allocation7], 7
    %v788 = vld [vmem:[%s787] sm:$0x1]
    %v790 = vlaneseq
    %v791 = vshrl.u32 %v790, 7
    %v792 = vsub.s32 0, %v791
    %v793 = vrot.slane %v788, %v792
    %795 = vmatprep.subr.mxu0 0.0
    %796 = vmatpush1.msra.mxu0 %v771
    %797 = vmatprep.subr.mxu0 0.0
    %798 = vmatpush1.msra.mxu0 %v772
    %799 = vmatprep.subr.mxu0 0.0
    %800 = vmatpush1.msra.mxu0 %v773
    %801 = vmatprep.subr.mxu0 0.0
    %802 = vmatpush1.msra.mxu0 %v774
    %803 = vmatprep.subr.mxu0 0.0
    %804 = vmatpush1.msra.mxu0 %v775
    %805 = vmatprep.subr.mxu0 0.0
    %806 = vmatpush1.msra.mxu0 %v776
    %807 = vmatprep.subr.mxu0 0.0
    %808 = vmatpush1.msra.mxu0 %v777
    %809 = vmatprep.subr.mxu0 0.0
    %810 = vmatpush1.msra.mxu0 %v778
    %811 = vmatprep.subr.mxu0 0.0
    %812 = vmatpush1.msra.mxu0 %v779
    %813 = vmatprep.subr.mxu0 0.0
    %814 = vmatpush1.msra.mxu0 %v780
    %815 = vmatprep.subr.mxu0 0.0
    %816 = vmatpush1.msra.mxu0 %v781
    %817 = vmatprep.subr.mxu0 0.0
    %818 = vmatpush1.msra.mxu0 %v782
    %819 = vmatprep.subr.mxu0 0.0
    %820 = vmatpush1.msra.mxu0 %v783
    %821 = vmatprep.subr.mxu0 0.0
    %822 = vmatpush1.msra.mxu0 %v784
    %823 = vmatprep.subr.mxu0 0.0
    %824 = vmatpush1.msra.mxu0 %v785
    %825 = vmatprep.subr.mxu0 0.0
    %826 = vmatpush1.msra.mxu0 %v786
    %827 = vmatprep.subr.mxu0 0.0
    %828 = vmatpush1.msra.mxu0 0.0
    %829 = vmatprep.subr.mxu0 0.0
    %830 = vmatpush1.msra.mxu0 0.0
    %831 = vmatprep.subr.mxu0 0.0
    %832 = vmatpush1.msra.mxu0 0.0
    %833 = vmatprep.subr.mxu0 0.0
    %834 = vmatpush1.msra.mxu0 0.0
    %835 = vmatprep.subr.mxu0 0.0
    %836 = vmatpush1.msra.mxu0 0.0
    %837 = vmatprep.subr.mxu0 0.0
    %838 = vmatpush1.msra.mxu0 0.0
    %839 = vmatprep.subr.mxu0 0.0
    %840 = vmatpush1.msra.mxu0 0.0
    %841 = vmatprep.subr.mxu0 0.0
    %842 = vmatpush1.msra.mxu0 0.0
    %843 = vmatprep.subr.mxu0 0.0
    %844 = vmatpush1.msra.mxu0 0.0
    %845 = vmatprep.subr.mxu0 0.0
    %846 = vmatpush1.msra.mxu0 0.0
    %847 = vmatprep.subr.mxu0 0.0
    %848 = vmatpush1.msra.mxu0 0.0
    %849 = vmatprep.subr.mxu0 0.0
    %850 = vmatpush1.msra.mxu0 0.0
    %851 = vmatprep.subr.mxu0 0.0
    %852 = vmatpush1.msra.mxu0 0.0
    %853 = vmatprep.subr.mxu0 0.0
    %854 = vmatpush1.msra.mxu0 0.0
    %855 = vmatprep.subr.mxu0 0.0
    %856 = vmatpush1.msra.mxu0 0.0
    %857 = vmatprep.subr.mxu0 0.0
    %858 = vmatpush1.msra.mxu0 0.0
    %859 = vmatprep.mubr.f32.mxu0 0.0
    %860 = vmatmul.mubr.f32.gmra.mrb[0].mxu0 %v768
    %v861 = vpop.f32.mrb[0].mxu0
    %v862 = vadd.f32 %v793, %v861
    %v863 = vpop.f32.mrb[0].mxu0
    %864 = vmatprep.mubr.f32.mxu0 0.0
    %865 = vmatmul.mubr.f32.gmra.mrb[0].mxu0 %v769
    %v866 = vpop.f32.mrb[0].mxu0
    %v867 = vadd.f32 %v793, %v866
    %v868 = vpop.f32.mrb[0].mxu0
    %869 = vdwg.mxu0
    %870 = vst [vmem:[#allocation8] sm:$0xff] %v862
    %871 = vst [vmem:[#allocation8 + $0x8] sm:$0xff] %v867
    // Predicated region
    $region26: #{tpu_custom_call.1} parent=1 // pred_check
      _
    $region27: #{tpu_custom_call.1} parent=1 // pred_check_branch
      %873 = sbr.rel (0) target = $region29
    $region28: #{tpu_custom_call.1} parent=1 // pred_region
      %s875 = ssub.s32 256, 256
      %876 = vsyncadd [#allocation4], %s875
      %s877 = sshll.u32 [#allocation8], 4
      %s878 = int_to_ptr.vmem [resolvable:$true] %s877
      %883 = dma.vmem_to_hbm [thread:$0]  %s878, 256, %s3, [#allocation4], 128, 128, 8
    $region29: #{tpu_custom_call.1} parent=1 // pred_fallthru
      _
    // Predicated region
    $region30: #{tpu_custom_call.1} parent=1 // pred_check
      _
    $region31: #{tpu_custom_call.1} parent=1 // pred_check_branch
      %885 = sbr.rel (0) target = $region33
    $region32: #{tpu_custom_call.1} parent=1 // pred_region
      %886 = dma.done [#allocation4], 256
    $region33: #{tpu_custom_call.1} parent=1 // pred_fallthru
      _
    %887 = vsyncpa [#allocation3], 1
    %888 = vsyncpa [#allocation6], 1
    %889 = vsyncpa [#allocation4], 1

</llo_original>
